<compile_context>
chip_gen: v7x
topology: tpu7x:2x2x1
jax: 0.10.0
libtpu: 0.0.40
codegen_flags: <defaults>
</compile_context>

<pallas_src>
import math

import jax
import jax.numpy as jnp
from jax.experimental import pallas as pl
from jax.experimental.pallas import tpu as pltpu


def aspect_autoencoder_kernel(xwrd_ref, mt_ref, batt_ref, wlin_ref, blin_ref,
                              aemb_ref, r_ref, aprobs_ref):
    # xwrd_ref:  [TB, L, E]   gathered word embeddings for TB batch rows
    # mt_ref:    [E, E]       M^T (resident)
    # batt_ref:  [1]          attention scalar bias (SMEM)
    # wlin_ref:  [E, A]       Linear weight, transposed (resident)
    # blin_ref:  [1, A]       Linear bias (resident)
    # aemb_ref:  [A, E]       aspect embedding matrix (resident)
    # r_ref:     [TB, E]      reconstruction output
    # aprobs_ref:[TB, A]      aspect probabilities output
    xw = xwrd_ref[...]                                            # [TB, L, E] f32
    x_avg = jnp.mean(xw, axis=1)                                  # [TB, E]

    # Attention logits: logits[b,l] = sum_e xw[b,l,e] * (x_avg @ M^T)[b,e]
    v = jnp.dot(x_avg, mt_ref[...],
                preferred_element_type=jnp.float32)               # [TB, E]
    logits = jnp.sum(xw * v[:, None, :], axis=-1)                 # [TB, L]
    logits = jnp.tanh(logits + batt_ref[0])

    # Softmax over the word axis L
    logits = logits - jnp.max(logits, axis=-1, keepdims=True)
    ew = jnp.exp(logits)
    attn = ew * pl.reciprocal(jnp.sum(ew, axis=-1, keepdims=True),
                              approx=True)                        # [TB, L]

    # enc = attention-weighted average of word embeddings
    z = jnp.sum(attn[:, :, None] * xw, axis=1)                    # [TB, E]

    # Linear layer + softmax over aspects
    xa = jnp.dot(z, wlin_ref[...],
                 preferred_element_type=jnp.float32) + blin_ref[...]   # [TB, A]
    xa = xa - jnp.max(xa, axis=-1, keepdims=True)
    ea = jnp.exp(xa)
    a_probs = ea * pl.reciprocal(jnp.sum(ea, axis=-1, keepdims=True),
                                 approx=True)                     # [TB, A]

    # Reconstruction: r = a_probs @ a_emb   (recon_method='centr')
    r = jnp.dot(a_probs, aemb_ref[...],
                preferred_element_type=jnp.float32)               # [TB, E]

    r_ref[...] = r.astype(r_ref.dtype)
    aprobs_ref[...] = a_probs.astype(aprobs_ref.dtype)


def aspect_autoencoder_forward(inputs, emb_table, M, b_att, W_lin, b_lin, a_emb,
                               *, tb=8):
    """Forward pass of AspectAutoencoder (attention=True, 'centr', eval mode).

    inputs:    int32 [B, L] token ids
    emb_table: f32   [V, E]
    M:         f32   [E, E]   attention matrix
    b_att:     f32   [1]      attention scalar bias
    W_lin:     f32   [A, E]   nn.Linear weight (PyTorch layout)
    b_lin:     f32   [A]      nn.Linear bias
    a_emb:     f32   [A, E]   aspect embeddings
    returns (r [B, E], a_probs [B, A])
    """
    # Glue: embedding gather stays in plain JAX for now (see TODO above).
    x_wrd = jnp.take(emb_table, inputs, axis=0).astype(jnp.float32)   # [B, L, E]
    B, L, E = x_wrd.shape
    A = a_emb.shape[0]

    # Batch tile: multiple of 8 sublanes; pad B up so the grid divides evenly.
    tb = max(8, (int(tb) // 8) * 8)
    Bp = pl.cdiv(B, tb) * tb
    if Bp != B:
        x_wrd = jnp.pad(x_wrd, ((0, Bp - B), (0, 0), (0, 0)))

    mt = M.T.astype(jnp.float32)                    # [E, E]
    wlt = W_lin.T.astype(jnp.float32)               # [E, A]
    blin2 = b_lin.reshape(1, A).astype(jnp.float32) # [1, A]
    aemb = a_emb.astype(jnp.float32)                # [A, E]
    batt = b_att.astype(jnp.float32)                # [1]

    r_pad, a_pad = pl.pallas_call(
        aspect_autoencoder_kernel,
        out_shape=(jax.ShapeDtypeStruct((Bp, E), jnp.float32),
                   jax.ShapeDtypeStruct((Bp, A), jnp.float32)),
        grid_spec=pltpu.PrefetchScalarGridSpec(
            num_scalar_prefetch=0,
            grid=(Bp // tb,),
            in_specs=[
                pl.BlockSpec((tb, L, E), lambda i: (i, 0, 0)),   # x_wrd tile
                pl.BlockSpec((E, E), lambda i: (0, 0)),          # M^T (resident)
                pl.BlockSpec(memory_space=pltpu.MemorySpace.SMEM),  # b_att
                pl.BlockSpec((E, A), lambda i: (0, 0)),          # W^T (resident)
                pl.BlockSpec((1, A), lambda i: (0, 0)),          # b_lin (resident)
                pl.BlockSpec((A, E), lambda i: (0, 0)),          # a_emb (resident)
            ],
            out_specs=[
                pl.BlockSpec((tb, E), lambda i: (i, 0)),
                pl.BlockSpec((tb, A), lambda i: (i, 0)),
            ],
        ),
        compiler_params=pltpu.CompilerParams(
            dimension_semantics=("parallel",)),
    )(x_wrd, mt, batt, wlt, blin2, aemb)

    return r_pad[:B], a_pad[:B]


def reference_forward(inputs, emb_table, M, b_att, W_lin, b_lin, a_emb):
    x_wrd = jnp.take(emb_table, inputs, axis=0)                   # [B, L, E]
    x_avg = jnp.mean(x_wrd, axis=1)                               # [B, E]
    x = jnp.einsum("ble,ef->blf", x_wrd, M)                       # [B, L, E]
    x = jnp.einsum("blf,bf->bl", x, x_avg)[..., None]             # [B, L, 1]
    x = jnp.tanh(x + b_att[0])
    a = jax.nn.softmax(x, axis=1)                                 # [B, L, 1]
    z = jnp.einsum("bl,ble->be", a[..., 0], x_wrd)                # [B, E]
    xl = z @ W_lin.T + b_lin                                      # [B, A]
    a_probs = jax.nn.softmax(xl, axis=1)                          # [B, A]
    r = a_probs @ a_emb                                           # [B, E]
    return r, a_probs


if __name__ == "__main__":
    key = jax.random.PRNGKey(0)
    k_emb, k_M, k_W, k_bl, k_a, k_idx = jax.random.split(key, 6)

    B, L = 16, 8            # batch, words per segment
    V, E, A = 32, 32, 10    # vocab, embedding dim, num_aspects

    # nn.Embedding default init: N(0, 1)
    emb_table = jax.random.normal(k_emb, (V, E), dtype=jnp.float32)

    # xavier_uniform for M
    lim_m = math.sqrt(6.0 / (E + E))
    M = jax.random.uniform(k_M, (E, E), minval=-lim_m, maxval=lim_m,
                           dtype=jnp.float32)

    # attention bias initialized to zero (bias=True, b=None)
    b_att = jnp.zeros((1,), dtype=jnp.float32)

    # Linear(emb_size, num_aspects) + aspect matrix (xavier-style ranges)
    lim_l = math.sqrt(6.0 / (E + A))
    W_lin = jax.random.uniform(k_W, (A, E), minval=-lim_l, maxval=lim_l,
                               dtype=jnp.float32)
    b_lin = jax.random.uniform(k_bl, (A,), minval=-lim_l, maxval=lim_l,
                               dtype=jnp.float32)
    a_emb = jax.random.uniform(k_a, (A, E), minval=-lim_l, maxval=lim_l,
                               dtype=jnp.float32)

    inputs = jax.random.randint(k_idx, (B, L), 0, V, dtype=jnp.int32)

    r, a_probs = aspect_autoencoder_forward(inputs, emb_table, M, b_att,
                                            W_lin, b_lin, a_emb, tb=8)
    (r, a_probs) = jax.block_until_ready((r, a_probs))

    r_ref, a_ref = reference_forward(inputs, emb_table, M, b_att,
                                     W_lin, b_lin, a_emb)

    assert r.shape == (B, E)
    assert a_probs.shape == (B, A)
    # Tolerance loosened slightly: softmax denominators use the EUP approximate
    # reciprocal (pl.reciprocal(..., approx=True)).
    assert jnp.allclose(a_probs, a_ref, atol=5e-3, rtol=5e-3)
    assert jnp.allclose(r, r_ref, atol=5e-3, rtol=5e-3)

    print("KERNEL_OK")
</pallas_src>

<mosaic_0001>
module attributes {stable_mosaic.version = 11 : i64} {
  func.func @aspect_autoencoder_kernel(%arg0: i32, %arg1: memref<8x8x32xf32, #tpu.memory_space<vmem>>, %arg2: memref<32x32xf32, #tpu.memory_space<vmem>>, %arg3: memref<1xf32, #tpu.memory_space<smem>>, %arg4: memref<32x10xf32, #tpu.memory_space<vmem>>, %arg5: memref<1x10xf32, #tpu.memory_space<vmem>>, %arg6: memref<10x32xf32, #tpu.memory_space<vmem>>, %arg7: memref<8x32xf32, #tpu.memory_space<vmem>>, %arg8: memref<8x10xf32, #tpu.memory_space<vmem>>) attributes {dimension_semantics = [#tpu.dimension_semantics<parallel>], iteration_bounds = array<i64: 2>, scalar_prefetch = 0 : i64, scratch_operands = 0 : i64, tpu.core_type = #tpu.core_type<tc>, window_params = [{transform_indices = @transform_0, window_bounds = array<i64: 8, 8, 32>}, {pipeline_mode = #tpu.pipeline_mode<synchronous>, transform_indices = @transform_1, window_bounds = array<i64: 32, 32>}, {transform_indices = @transform_2, window_bounds = array<i64: 1>}, {pipeline_mode = #tpu.pipeline_mode<synchronous>, transform_indices = @transform_3, window_bounds = array<i64: 32, 10>}, {pipeline_mode = #tpu.pipeline_mode<synchronous>, transform_indices = @transform_4, window_bounds = array<i64: 1, 10>}, {pipeline_mode = #tpu.pipeline_mode<synchronous>, transform_indices = @transform_5, window_bounds = array<i64: 10, 32>}, {transform_indices = @transform_6, window_bounds = array<i64: 8, 32>}, {transform_indices = @transform_7, window_bounds = array<i64: 8, 10>}]} {
    %c0 = arith.constant 0 : index
    %c0_0 = arith.constant 0 : index
    %c0_1 = arith.constant 0 : index
    %0 = vector.load %arg1[%c0, %c0_0, %c0_1] : memref<8x8x32xf32, #tpu.memory_space<vmem>>, vector<8x8x32xf32>
    %cst = arith.constant dense<0.000000e+00> : vector<8x32xf32>
    %1 = vector.multi_reduction <add>, %0, %cst [1] : vector<8x8x32xf32> to vector<8x32xf32>
    %cst_2 = arith.constant 8.000000e+00 : f32
    %2 = vector.broadcast %cst_2 : f32 to vector<8x32xf32>
    %3 = arith.divf %1, %2 : vector<8x32xf32>
    %c0_3 = arith.constant 0 : index
    %c0_4 = arith.constant 0 : index
    %4 = vector.load %arg2[%c0_3, %c0_4] : memref<32x32xf32, #tpu.memory_space<vmem>>, vector<32x32xf32>
    %cst_5 = arith.constant dense<0.000000e+00> : vector<8x32xf32>
    %5 = tpu.matmul %3, %4, %cst_5 {dimension_numbers = #tpu.dot_dimension_numbers<[1], [0], [0], [1], [0, 0, 1, 1], [], []>} : vector<8x32xf32>, vector<32x32xf32>, vector<8x32xf32> -> vector<8x32xf32>
    %6 = vector.shape_cast %5 : vector<8x32xf32> to vector<8x1x32xf32>
    %7 = vector.broadcast %6 : vector<8x1x32xf32> to vector<8x8x32xf32>
    %8 = arith.mulf %0, %7 : vector<8x8x32xf32>
    %cst_6 = arith.constant dense<0.000000e+00> : vector<8x8xf32>
    %9 = vector.multi_reduction <add>, %8, %cst_6 [2] : vector<8x8x32xf32> to vector<8x8xf32>
    %c0_7 = arith.constant 0 : index
    %10 = memref.load %arg3[%c0_7] : memref<1xf32, #tpu.memory_space<smem>>
    %11 = vector.broadcast %10 : f32 to vector<8x8xf32>
    %12 = arith.addf %9, %11 : vector<8x8xf32>
    %13 = math.tanh %12 : vector<8x8xf32>
    %cst_8 = arith.constant dense<0xFF800000> : vector<8xf32>
    %14 = vector.multi_reduction <maximumf>, %13, %cst_8 [1] : vector<8x8xf32> to vector<8xf32>
    %15 = vector.shape_cast %14 : vector<8xf32> to vector<8x1xf32>
    %16 = vector.broadcast %15 : vector<8x1xf32> to vector<8x8xf32>
    %17 = arith.subf %13, %16 : vector<8x8xf32>
    %18 = math.exp %17 : vector<8x8xf32>
    %cst_9 = arith.constant dense<0.000000e+00> : vector<8xf32>
    %19 = vector.multi_reduction <add>, %18, %cst_9 [1] : vector<8x8xf32> to vector<8xf32>
    %20 = vector.shape_cast %19 : vector<8xf32> to vector<8x1xf32>
    %21 = tpu.reciprocal %20 {approx = true} : vector<8x1xf32> -> vector<8x1xf32>
    %22 = vector.broadcast %21 : vector<8x1xf32> to vector<8x8xf32>
    %23 = arith.mulf %18, %22 : vector<8x8xf32>
    %24 = vector.shape_cast %23 : vector<8x8xf32> to vector<8x8x1xf32>
    %25 = vector.broadcast %24 : vector<8x8x1xf32> to vector<8x8x32xf32>
    %26 = arith.mulf %25, %0 : vector<8x8x32xf32>
    %cst_10 = arith.constant dense<0.000000e+00> : vector<8x32xf32>
    %27 = vector.multi_reduction <add>, %26, %cst_10 [1] : vector<8x8x32xf32> to vector<8x32xf32>
    %c0_11 = arith.constant 0 : index
    %c0_12 = arith.constant 0 : index
    %28 = vector.load %arg4[%c0_11, %c0_12] : memref<32x10xf32, #tpu.memory_space<vmem>>, vector<32x10xf32>
    %cst_13 = arith.constant dense<0.000000e+00> : vector<8x10xf32>
    %29 = tpu.matmul %27, %28, %cst_13 {dimension_numbers = #tpu.dot_dimension_numbers<[1], [0], [0], [1], [0, 0, 1, 1], [], []>} : vector<8x32xf32>, vector<32x10xf32>, vector<8x10xf32> -> vector<8x10xf32>
    %c0_14 = arith.constant 0 : index
    %c0_15 = arith.constant 0 : index
    %30 = vector.load %arg5[%c0_14, %c0_15] : memref<1x10xf32, #tpu.memory_space<vmem>>, vector<1x10xf32>
    %31 = vector.broadcast %30 : vector<1x10xf32> to vector<8x10xf32>
    %32 = arith.addf %29, %31 : vector<8x10xf32>
    %cst_16 = arith.constant dense<0xFF800000> : vector<8xf32>
    %33 = vector.multi_reduction <maximumf>, %32, %cst_16 [1] : vector<8x10xf32> to vector<8xf32>
    %34 = vector.shape_cast %33 : vector<8xf32> to vector<8x1xf32>
    %35 = vector.broadcast %34 : vector<8x1xf32> to vector<8x10xf32>
    %36 = arith.subf %32, %35 : vector<8x10xf32>
    %37 = math.exp %36 : vector<8x10xf32>
    %cst_17 = arith.constant dense<0.000000e+00> : vector<8xf32>
    %38 = vector.multi_reduction <add>, %37, %cst_17 [1] : vector<8x10xf32> to vector<8xf32>
    %39 = vector.shape_cast %38 : vector<8xf32> to vector<8x1xf32>
    %40 = tpu.reciprocal %39 {approx = true} : vector<8x1xf32> -> vector<8x1xf32>
    %41 = vector.broadcast %40 : vector<8x1xf32> to vector<8x10xf32>
    %42 = arith.mulf %37, %41 : vector<8x10xf32>
    %c0_18 = arith.constant 0 : index
    %c0_19 = arith.constant 0 : index
    %43 = vector.load %arg6[%c0_18, %c0_19] : memref<10x32xf32, #tpu.memory_space<vmem>>, vector<10x32xf32>
    %cst_20 = arith.constant dense<0.000000e+00> : vector<8x32xf32>
    %44 = tpu.matmul %42, %43, %cst_20 {dimension_numbers = #tpu.dot_dimension_numbers<[1], [0], [0], [1], [0, 0, 1, 1], [], []>} : vector<8x10xf32>, vector<10x32xf32>, vector<8x32xf32> -> vector<8x32xf32>
    %c0_21 = arith.constant 0 : index
    %c0_22 = arith.constant 0 : index
    %45 = vector.load %arg7[%c0_21, %c0_22] : memref<8x32xf32, #tpu.memory_space<vmem>>, vector<8x32xf32>
    tpu.vector_store %arg7[%c0_21, %c0_22], %44 {strides = array<i32>} : memref<8x32xf32, #tpu.memory_space<vmem>>, vector<8x32xf32>,
    %c0_23 = arith.constant 0 : index
    %c0_24 = arith.constant 0 : index
    %46 = vector.load %arg8[%c0_23, %c0_24] : memref<8x10xf32, #tpu.memory_space<vmem>>, vector<8x10xf32>
    tpu.vector_store %arg8[%c0_23, %c0_24], %42 {strides = array<i32>} : memref<8x10xf32, #tpu.memory_space<vmem>>, vector<8x10xf32>,
    return
  }
  func.func @transform_0(%arg0: i32) -> (i32, i32, i32) {
    %c0_i32 = arith.constant 0 : i32
    %c0_i32_0 = arith.constant 0 : i32
    %c0_i32_1 = arith.constant 0 : i32
    return %arg0, %c0_i32, %c0_i32_0 : i32, i32, i32
  }
  func.func @transform_1(%arg0: i32) -> (i32, i32) {
    %c0_i32 = arith.constant 0 : i32
    %c0_i32_0 = arith.constant 0 : i32
    %c0_i32_1 = arith.constant 0 : i32
    return %c0_i32, %c0_i32_0 : i32, i32
  }
  func.func @transform_2(%arg0: i32) -> i32 {
    %c0_i32 = arith.constant 0 : i32
    %c0_i32_0 = arith.constant 0 : i32
    return %c0_i32 : i32
  }
  func.func @transform_3(%arg0: i32) -> (i32, i32) {
    %c0_i32 = arith.constant 0 : i32
    %c0_i32_0 = arith.constant 0 : i32
    %c0_i32_1 = arith.constant 0 : i32
    return %c0_i32, %c0_i32_0 : i32, i32
  }
  func.func @transform_4(%arg0: i32) -> (i32, i32) {
    %c0_i32 = arith.constant 0 : i32
    %c0_i32_0 = arith.constant 0 : i32
    %c0_i32_1 = arith.constant 0 : i32
    return %c0_i32, %c0_i32_0 : i32, i32
  }
  func.func @transform_5(%arg0: i32) -> (i32, i32) {
    %c0_i32 = arith.constant 0 : i32
    %c0_i32_0 = arith.constant 0 : i32
    %c0_i32_1 = arith.constant 0 : i32
    return %c0_i32, %c0_i32_0 : i32, i32
  }
  func.func @transform_6(%arg0: i32) -> (i32, i32) {
    %c0_i32 = arith.constant 0 : i32
    %c0_i32_0 = arith.constant 0 : i32
    return %arg0, %c0_i32 : i32, i32
  }
  func.func @transform_7(%arg0: i32) -> (i32, i32) {
    %c0_i32 = arith.constant 0 : i32
    %c0_i32_0 = arith.constant 0 : i32
    return %arg0, %c0_i32 : i32, i32
  }
}

</mosaic_0001>

<llo_original>
// kernel: tpu_custom_call.1
$region0: #{tpu_custom_call.1}
  #allocation0 [shape = 'u32[]', space=smem, size = 0x4, offset = 0x4, fixed_abs, tag = 'smem constant byte address 0x4 - core index']
  #allocation1 [shape = 'u32[144,128]{1,0:T(1,128)}', space=vmem, size = 0x12000, scoped, tag = 'internal scratch']
  #allocation2 [shape = 'f32[1]{0:T(128)S(6)}', space=smem, size = 0x200, scoped, tag = 'scoped memory for tpu_custom_call.1']
  %s0 = inlined_call_operand.hbm [shape: f32[16,8,32], index: 0, kind: input, shape index: {}]
  %s1 = inlined_call_operand.vmem [shape: f32[32,32], index: 1, kind: input, shape index: {}]
  %s2 = inlined_call_operand.<no memory space> [shape: f32[1], index: 2, kind: input, shape index: {}]
  %s3 = inlined_call_operand.vmem [shape: f32[32,10], index: 3, kind: input, shape index: {}]
  %s4 = inlined_call_operand.vmem [shape: f32[1,10], index: 4, kind: input, shape index: {}]
  %s5 = inlined_call_operand.vmem [shape: f32[10,32], index: 5, kind: input, shape index: {}]
  %s6 = inlined_call_operand.hbm [shape: f32[16,32], index: 6, kind: output, shape index: {0}]
  %s7 = inlined_call_operand.hbm [shape: f32[16,10], index: 7, kind: output, shape index: {1}]
  %8 = xla_tuple %s6, %s7
  %s9 = sld [smem:[#allocation0]]
  $region69: #{tpu_custom_call.1} parent=0
    _
  %s11 = ssub.s32 1, %s9
  %s12 = scalar_select 0, %s11, %s9
  %13 = sst [smem:[#allocation2]] %s2
  $region1: #{tpu_custom_call.1} parent=0
    #allocation3 [shape = 'u8[65536]{0}', space=vmem, size = 0x10000, scoped, tag = 'input window, operand 0']
    #allocation4 [shape = 's32[2]{0}', space=sflag, size = 0x8, scoped, tag = 'scoped memory for tpu_custom_call.1']
    #allocation5 [shape = 's32[2]{0}', space=sflag, size = 0x8, scoped, tag = 'scoped memory for tpu_custom_call.1']
    #allocation6 [shape = 'u8[8192]{0}', space=vmem, size = 0x2000, scoped, tag = 'output window, operand 0']
    #allocation7 [shape = 'u8[8192]{0}', space=vmem, size = 0x2000, scoped, tag = 'output window, operand 1']
    #allocation8 [shape = 's32[2]{0}', space=sflag, size = 0x8, scoped, tag = 'scoped memory for tpu_custom_call.1']
    %14 = vsyncpa [#allocation4], 0
    %s15 = scalar_lea.sflag [#allocation4], 1
    %16 = vsyncpa %s15, 0
    %17 = vsyncpa [#allocation5], 0
    %s18 = scalar_lea.sflag [#allocation5], 1
    %19 = vsyncpa %s18, 0
    %20 = vsyncpa [#allocation8], 0
    %s21 = scalar_lea.sflag [#allocation8], 1
    %22 = vsyncpa %s21, 0
    loop: start=0, step=1, limit=4
    $region2: #{tpu_custom_call.1} parent=1 // loop_pre_header
      _
    $region3: #{tpu_custom_call.1} parent=1 // loop_header
      %s24 = sphi 0, %s28
      %p25 = scmp.ge.s32.totalorder %s24, 4
      %s34 = sphi 0, %s36
      %s37 = sphi 0, %s34
      %s38 = sphi 0, %s37
      %s54 = sphi 0, %s38
      %s58 = sphi 0, %s58
      %s60 = sphi 0, %s58
      %s61 = sphi 0, %s60
      %s75 = sphi 0, %s61
      %s79 = sphi 0, %s79
      %s81 = sphi 0, %s79
      %s82 = sphi 0, %s81
      %s96 = sphi 0, %s82
      %s100 = sphi 0, %s100
      %s102 = sphi 0, %s100
      %s103 = sphi 0, %s102
      %s117 = sphi 0, %s103
      %s121 = sphi 0, %s121
      %s123 = sphi 0, %s121
      %s124 = sphi 0, %s123
      %s138 = sphi 0, %s124
      %s142 = sphi 0, %s142
      %s144 = sphi 0, %s142
      %s145 = sphi 0, %s144
      %s159 = sphi 0, %s145
      %s165 = sphi 0, %s167
      %s168 = sphi 0, %s165
      %s169 = sphi 0, %s168
      %s185 = sphi 0, %s169
      %s191 = sphi 0, %s193
      %s194 = sphi 0, %s191
      %s195 = sphi 0, %s194
      %s211 = sphi 0, %s195
    $region4: #{tpu_custom_call.1} parent=1 // loop_header_branch
      %27 = sbr.rel (%p25) target = $region8
    $region5: #{tpu_custom_call.1} parent=1 // loop_body
      %s29 = ssub.s32 %s24, 1
      %s30 = ssub.s32 %s24, 2
      %s31 = sadd.s32 %s24, 1
      %s32 = ssub.s32 %s24, %s31
      %p33 = scmp.eq.s32.totalorder %s32, 0
      %s35 = sadd.s32 %s34, 1
      %s36 = scalar_select %p33, %s34, %s35
      %p39 = pneg %p33
      %p40 = scmp.eq.s32.totalorder %s24, 1
      %p41 = por %p39, %p40
      %p42 = scmp.ne.s32.totalorder %s34, %s37
      %p43 = scmp.eq.s32.totalorder %s24, 0
      %p44 = por %p42, %p43
      %p45 = scmp.ne.s32.totalorder %s34, %s37
      %p46 = scmp.eq.s32.totalorder %s29, 1
      %p47 = por %p45, %p46
      %p48 = scmp.ne.s32.totalorder %s37, %s38
      %p49 = scmp.eq.s32.totalorder %s29, 0
      %p50 = por %p48, %p49
      %p51 = scmp.ne.s32.totalorder %s37, %s38
      %p52 = scmp.eq.s32.totalorder %s30, 1
      %p53 = por %p51, %p52
      %p55 = scmp.ne.s32.totalorder %s38, %s54
      %p56 = scmp.eq.s32.totalorder %s30, 0
      %p57 = por %p55, %p56
      %s59 = sadd.s32 %s58, 1
      %p62 = scmp.eq.s32.totalorder %s24, 1
      %p63 = scmp.ne.s32.totalorder %s58, %s60
      %p64 = scmp.eq.s32.totalorder %s24, 0
      %p65 = por %p63, %p64
      %p66 = scmp.ne.s32.totalorder %s58, %s60
      %p67 = scmp.eq.s32.totalorder %s29, 1
      %p68 = por %p66, %p67
      %p69 = scmp.ne.s32.totalorder %s60, %s61
      %p70 = scmp.eq.s32.totalorder %s29, 0
      %p71 = por %p69, %p70
      %p72 = scmp.ne.s32.totalorder %s60, %s61
      %p73 = scmp.eq.s32.totalorder %s30, 1
      %p74 = por %p72, %p73
      %p76 = scmp.ne.s32.totalorder %s61, %s75
      %p77 = scmp.eq.s32.totalorder %s30, 0
      %p78 = por %p76, %p77
      %s80 = sadd.s32 %s79, 1
      %p83 = scmp.eq.s32.totalorder %s24, 1
      %p84 = scmp.ne.s32.totalorder %s79, %s81
      %p85 = scmp.eq.s32.totalorder %s24, 0
      %p86 = por %p84, %p85
      %p87 = scmp.ne.s32.totalorder %s79, %s81
      %p88 = scmp.eq.s32.totalorder %s29, 1
      %p89 = por %p87, %p88
      %p90 = scmp.ne.s32.totalorder %s81, %s82
      %p91 = scmp.eq.s32.totalorder %s29, 0
      %p92 = por %p90, %p91
      %p93 = scmp.ne.s32.totalorder %s81, %s82
      %p94 = scmp.eq.s32.totalorder %s30, 1
      %p95 = por %p93, %p94
      %p97 = scmp.ne.s32.totalorder %s82, %s96
      %p98 = scmp.eq.s32.totalorder %s30, 0
      %p99 = por %p97, %p98
      %s101 = sadd.s32 %s100, 1
      %p104 = scmp.eq.s32.totalorder %s24, 1
      %p105 = scmp.ne.s32.totalorder %s100, %s102
      %p106 = scmp.eq.s32.totalorder %s24, 0
      %p107 = por %p105, %p106
      %p108 = scmp.ne.s32.totalorder %s100, %s102
      %p109 = scmp.eq.s32.totalorder %s29, 1
      %p110 = por %p108, %p109
      %p111 = scmp.ne.s32.totalorder %s102, %s103
      %p112 = scmp.eq.s32.totalorder %s29, 0
      %p113 = por %p111, %p112
      %p114 = scmp.ne.s32.totalorder %s102, %s103
      %p115 = scmp.eq.s32.totalorder %s30, 1
      %p116 = por %p114, %p115
      %p118 = scmp.ne.s32.totalorder %s103, %s117
      %p119 = scmp.eq.s32.totalorder %s30, 0
      %p120 = por %p118, %p119
      %s122 = sadd.s32 %s121, 1
      %p125 = scmp.eq.s32.totalorder %s24, 1
      %p126 = scmp.ne.s32.totalorder %s121, %s123
      %p127 = scmp.eq.s32.totalorder %s24, 0
      %p128 = por %p126, %p127
      %p129 = scmp.ne.s32.totalorder %s121, %s123
      %p130 = scmp.eq.s32.totalorder %s29, 1
      %p131 = por %p129, %p130
      %p132 = scmp.ne.s32.totalorder %s123, %s124
      %p133 = scmp.eq.s32.totalorder %s29, 0
      %p134 = por %p132, %p133
      %p135 = scmp.ne.s32.totalorder %s123, %s124
      %p136 = scmp.eq.s32.totalorder %s30, 1
      %p137 = por %p135, %p136
      %p139 = scmp.ne.s32.totalorder %s124, %s138
      %p140 = scmp.eq.s32.totalorder %s30, 0
      %p141 = por %p139, %p140
      %s143 = sadd.s32 %s142, 1
      %p146 = scmp.eq.s32.totalorder %s24, 1
      %p147 = scmp.ne.s32.totalorder %s142, %s144
      %p148 = scmp.eq.s32.totalorder %s24, 0
      %p149 = por %p147, %p148
      %p150 = scmp.ne.s32.totalorder %s142, %s144
      %p151 = scmp.eq.s32.totalorder %s29, 1
      %p152 = por %p150, %p151
      %p153 = scmp.ne.s32.totalorder %s144, %s145
      %p154 = scmp.eq.s32.totalorder %s29, 0
      %p155 = por %p153, %p154
      %p156 = scmp.ne.s32.totalorder %s144, %s145
      %p157 = scmp.eq.s32.totalorder %s30, 1
      %p158 = por %p156, %p157
      %p160 = scmp.ne.s32.totalorder %s145, %s159
      %p161 = scmp.eq.s32.totalorder %s30, 0
      %p162 = por %p160, %p161
      %s163 = ssub.s32 %s24, %s31
      %p164 = scmp.eq.s32.totalorder %s163, 0
      %s166 = sadd.s32 %s165, 1
      %s167 = scalar_select %p164, %s165, %s166
      %p170 = pneg %p164
      %p171 = scmp.eq.s32.totalorder %s24, 1
      %p172 = por %p170, %p171
      %p173 = scmp.ne.s32.totalorder %s165, %s168
      %p174 = scmp.eq.s32.totalorder %s24, 0
      %p175 = por %p173, %p174
      %p176 = scmp.ne.s32.totalorder %s165, %s168
      %p177 = scmp.eq.s32.totalorder %s29, 1
      %p178 = por %p176, %p177
      %p179 = scmp.ne.s32.totalorder %s168, %s169
      %p180 = scmp.eq.s32.totalorder %s29, 0
      %p181 = por %p179, %p180
      %p182 = scmp.ne.s32.totalorder %s168, %s169
      %p183 = scmp.eq.s32.totalorder %s30, 1
      %p184 = por %p182, %p183
      %p186 = scmp.ne.s32.totalorder %s169, %s185
      %p187 = scmp.eq.s32.totalorder %s30, 0
      %p188 = por %p186, %p187
      %s189 = ssub.s32 %s24, %s31
      %p190 = scmp.eq.s32.totalorder %s189, 0
      %s192 = sadd.s32 %s191, 1
      %s193 = scalar_select %p190, %s191, %s192
      %p196 = pneg %p190
      %p197 = scmp.eq.s32.totalorder %s24, 1
      %p198 = por %p196, %p197
      %p199 = scmp.ne.s32.totalorder %s191, %s194
      %p200 = scmp.eq.s32.totalorder %s24, 0
      %p201 = por %p199, %p200
      %p202 = scmp.ne.s32.totalorder %s191, %s194
      %p203 = scmp.eq.s32.totalorder %s29, 1
      %p204 = por %p202, %p203
      %p205 = scmp.ne.s32.totalorder %s194, %s195
      %p206 = scmp.eq.s32.totalorder %s29, 0
      %p207 = por %p205, %p206
      %p208 = scmp.ne.s32.totalorder %s194, %s195
      %p209 = scmp.eq.s32.totalorder %s30, 1
      %p210 = por %p208, %p209
      %p212 = scmp.ne.s32.totalorder %s195, %s211
      %p213 = scmp.eq.s32.totalorder %s30, 0
      %p214 = por %p212, %p213
      %p215 = scmp.le.s32.totalorder 1, %s24
      %p216 = scmp.lt.s32.totalorder %s24, 3
      %p217 = pnand %p215, %p216
      %p218 = pneg %p217
      // Predicated region
      $region9: #{tpu_custom_call.1} parent=5 // pred_check
        _
      $region10: #{tpu_custom_call.1} parent=5 // pred_check_branch
        %220 = sbr.rel (%p217) target = $region12
      $region11: #{tpu_custom_call.1} parent=5 // pred_region
        %s221 = ssub.s32 %s24, 1
        // Predicated region
        $region13: #{tpu_custom_call.1} parent=11 // pred_check
          %p222 = pneg %p71
        $region14: #{tpu_custom_call.1} parent=11 // pred_check_branch
          %224 = sbr.rel (%p222) target = $region16
        $region15: #{tpu_custom_call.1} parent=11 // pred_region
          _
        $region16: #{tpu_custom_call.1} parent=11 // pred_fallthru
          _
        // Predicated region
        $region17: #{tpu_custom_call.1} parent=11 // pred_check
          %p225 = pneg %p92
        $region18: #{tpu_custom_call.1} parent=11 // pred_check_branch
          %227 = sbr.rel (%p225) target = $region20
        $region19: #{tpu_custom_call.1} parent=11 // pred_region
          _
        $region20: #{tpu_custom_call.1} parent=11 // pred_fallthru
          _
        // Predicated region
        $region21: #{tpu_custom_call.1} parent=11 // pred_check
          %p228 = pneg %p113
        $region22: #{tpu_custom_call.1} parent=11 // pred_check_branch
          %230 = sbr.rel (%p228) target = $region24
        $region23: #{tpu_custom_call.1} parent=11 // pred_region
          _
        $region24: #{tpu_custom_call.1} parent=11 // pred_fallthru
          _
        // Predicated region
        $region25: #{tpu_custom_call.1} parent=11 // pred_check
          %p231 = pneg %p134
        $region26: #{tpu_custom_call.1} parent=11 // pred_check_branch
          %233 = sbr.rel (%p231) target = $region28
        $region27: #{tpu_custom_call.1} parent=11 // pred_region
          _
        $region28: #{tpu_custom_call.1} parent=11 // pred_fallthru
          _
        // Predicated region
        $region29: #{tpu_custom_call.1} parent=11 // pred_check
          %p234 = pneg %p155
        $region30: #{tpu_custom_call.1} parent=11 // pred_check_branch
          %236 = sbr.rel (%p234) target = $region32
        $region31: #{tpu_custom_call.1} parent=11 // pred_region
          _
        $region32: #{tpu_custom_call.1} parent=11 // pred_fallthru
          _
      $region12: #{tpu_custom_call.1} parent=5 // pred_fallthru
        _
      %p237 = scmp.lt.s32.totalorder %s24, 2
      // Predicated region
      $region33: #{tpu_custom_call.1} parent=5 // pred_check
        %p238 = pneg %p237
      $region34: #{tpu_custom_call.1} parent=5 // pred_check_branch
        %240 = sbr.rel (%p238) target = $region36
      $region35: #{tpu_custom_call.1} parent=5 // pred_region
        // Predicated region
        $region37: #{tpu_custom_call.1} parent=35 // pred_check
          %p241 = pneg %p44
        $region38: #{tpu_custom_call.1} parent=35 // pred_check_branch
          %243 = sbr.rel (%p241) target = $region40
        $region39: #{tpu_custom_call.1} parent=35 // pred_region
          %s244 = sand.u32 %s34, 1
          %s245 = scalar_lea.sflag [#allocation4], %s244
          %s246 = sand.u32 %s34, 1
          %s247 = smul.addr %s246, 64
          %s248 = scalar_lea.vmem [#allocation3], %s247
          %s249 = smul.u32 8, %s24
          %s251 = ssub.s32 1024, 1024
          %252 = vsyncadd %s245, %s251
          %s253 = smul.addr %s249, 128
          %s254 = scalar_lea.hbm %s0, %s253
          %s255 = sshll.u32 %s248, 4
          %s256 = int_to_ptr.vmem [resolvable:$true] %s255
          %261 = dma.hbm_to_vmem [thread:$0]  %s254, 1024, %s256, %s245, 128, 128, 8
        $region40: #{tpu_custom_call.1} parent=35 // pred_fallthru
          _
      $region36: #{tpu_custom_call.1} parent=5 // pred_fallthru
        _
      %p262 = scmp.le.s32.totalorder 1, %s24
      %p263 = scmp.lt.s32.totalorder %s24, 3
      %p264 = pnand %p262, %p263
      %p265 = pneg %p264
      // Predicated region
      $region41: #{tpu_custom_call.1} parent=5 // pred_check
        _
      $region42: #{tpu_custom_call.1} parent=5 // pred_check_branch
        %267 = sbr.rel (%p264) target = $region44
      $region43: #{tpu_custom_call.1} parent=5 // pred_region
        %s268 = ssub.s32 %s24, 1
        %s269 = sand.u32 %s37, 1
        %s270 = scalar_lea.sflag [#allocation4], %s269
        %s271 = sand.u32 %s37, 1
        %s272 = smul.addr %s271, 64
        %s273 = scalar_lea.vmem [#allocation3], %s272
        // Predicated region
        $region45: #{tpu_custom_call.1} parent=43 // pred_check
          %p274 = pneg %p50
        $region46: #{tpu_custom_call.1} parent=43 // pred_check_branch
          %276 = sbr.rel (%p274) target = $region48
        $region47: #{tpu_custom_call.1} parent=43 // pred_region
          %277 = dma.done %s270, 1024
        $region48: #{tpu_custom_call.1} parent=43 // pred_fallthru
          _
        %s278 = sand.u32 %s37, 1
        %s279 = scalar_lea.sflag [#allocation4], %s278
        %s280 = sand.u32 %s37, 1
        %s281 = smul.addr %s280, 64
        %s282 = scalar_lea.vmem [#allocation3], %s281
        %p283 = pneg %p50
        %p284 = pneg %p47
        %p285 = pneg %p71
        %p286 = pneg %p68
        %p287 = pneg %p92
        %p288 = pneg %p89
        %p289 = pneg %p113
        %p290 = pneg %p110
        %p291 = pneg %p134
        %p292 = pneg %p131
        %p293 = pneg %p155
        %p294 = pneg %p152
        %p295 = pneg %p181
        %p296 = pneg %p178
        %s297 = sand.u32 %s168, 1
        %s298 = scalar_lea.sflag [#allocation5], %s297
        %s299 = sand.u32 %s168, 1
        %s300 = smul.addr %s299, 8
        %s301 = scalar_lea.vmem [#allocation6], %s300
        %p302 = pneg %p207
        %p303 = pneg %p204
        %s304 = sand.u32 %s194, 1
        %s305 = scalar_lea.sflag [#allocation8], %s304
        %s306 = sand.u32 %s194, 1
        %s307 = smul.addr %s306, 8
        %s308 = scalar_lea.vmem [#allocation7], %s307
        %s309 = smul.u32 8, %s29
        %v310 = vld [vmem:[%s273] sm:$0xff]
        %v311 = vld [vmem:[%s273 + $0x8] sm:$0xff]
        %v312 = vld [vmem:[%s273 + $0x10] sm:$0xff]
        %v313 = vld [vmem:[%s273 + $0x18] sm:$0xff]
        %v314 = vld [vmem:[%s273 + $0x20] sm:$0xff]
        %v315 = vld [vmem:[%s273 + $0x28] sm:$0xff]
        %v316 = vld [vmem:[%s273 + $0x30] sm:$0xff]
        %v317 = vld [vmem:[%s273 + $0x38] sm:$0xff]
        %vm318 = vcmask 261120
        %v319 = vsel %vm318, %v310, 0.0
        %v320 = vrot.slane %v319, 4
        %v321 = vadd.f32 %v319, %v320
        %v322 = vrot.slane %v321, 2
        %v323 = vadd.f32 %v321, %v322
        %v324 = vrot.slane %v323, 1
        %v325 = vadd.f32 %v323, %v324
        %v326 = vsel %vm318, %v311, 0.0
        %v327 = vrot.slane %v326, 4
        %v328 = vadd.f32 %v326, %v327
        %v329 = vrot.slane %v328, 2
        %v330 = vadd.f32 %v328, %v329
        %v331 = vrot.slane %v330, 1
        %v332 = vadd.f32 %v330, %v331
        %v333 = vsel %vm318, %v312, 0.0
        %v334 = vrot.slane %v333, 4
        %v335 = vadd.f32 %v333, %v334
        %v336 = vrot.slane %v335, 2
        %v337 = vadd.f32 %v335, %v336
        %v338 = vrot.slane %v337, 1
        %v339 = vadd.f32 %v337, %v338
        %v340 = vsel %vm318, %v313, 0.0
        %v341 = vrot.slane %v340, 4
        %v342 = vadd.f32 %v340, %v341
        %v343 = vrot.slane %v342, 2
        %v344 = vadd.f32 %v342, %v343
        %v345 = vrot.slane %v344, 1
        %v346 = vadd.f32 %v344, %v345
        %v347 = vsel %vm318, %v314, 0.0
        %v348 = vrot.slane %v347, 4
        %v349 = vadd.f32 %v347, %v348
        %v350 = vrot.slane %v349, 2
        %v351 = vadd.f32 %v349, %v350
        %v352 = vrot.slane %v351, 1
        %v353 = vadd.f32 %v351, %v352
        %v354 = vsel %vm318, %v315, 0.0
        %v355 = vrot.slane %v354, 4
        %v356 = vadd.f32 %v354, %v355
        %v357 = vrot.slane %v356, 2
        %v358 = vadd.f32 %v356, %v357
        %v359 = vrot.slane %v358, 1
        %v360 = vadd.f32 %v358, %v359
        %v361 = vsel %vm318, %v316, 0.0
        %v362 = vrot.slane %v361, 4
        %v363 = vadd.f32 %v361, %v362
        %v364 = vrot.slane %v363, 2
        %v365 = vadd.f32 %v363, %v364
        %v366 = vrot.slane %v365, 1
        %v367 = vadd.f32 %v365, %v366
        %v368 = vsel %vm318, %v317, 0.0
        %v369 = vrot.slane %v368, 4
        %v370 = vadd.f32 %v368, %v369
        %v371 = vrot.slane %v370, 2
        %v372 = vadd.f32 %v370, %v371
        %v373 = vrot.slane %v372, 1
        %v374 = vadd.f32 %v372, %v373
        %v375 = vrcp.pop 8.0
        %v376 = vmul.f32 %v325, %v375
        %v377 = vmul.f32 %v332, %v375
        %v378 = vmul.f32 %v339, %v375
        %v379 = vmul.f32 %v346, %v375
        %v380 = vmul.f32 %v353, %v375
        %v381 = vmul.f32 %v360, %v375
        %v382 = vmul.f32 %v367, %v375
        %v383 = vmul.f32 %v374, %v375
        %v384 = vld [vmem:[%s1] sm:$0xff]
        %v385 = vld [vmem:[%s1 + $0x8] sm:$0xff]
        %v386 = vld [vmem:[%s1 + $0x10] sm:$0xff]
        %v387 = vld [vmem:[%s1 + $0x18] sm:$0xff]
        %vm396 = vcmask 1041409
        %v397 = vsel %vm396, %v377, %v376
        %vm398 = vcmask 1042434
        %v399 = vsel %vm398, %v378, %v397
        %vm400 = vcmask 1043459
        %v401 = vsel %vm400, %v379, %v399
        %vm402 = vcmask 1044484
        %v403 = vsel %vm402, %v380, %v401
        %vm404 = vcmask 1045509
        %v405 = vsel %vm404, %v381, %v403
        %vm406 = vcmask 1046534
        %v407 = vsel %vm406, %v382, %v405
        %vm408 = vcmask 1047559
        %v409 = vsel %vm408, %v383, %v407
        %v410 = vsel %vm318, %v409, 0
        %412 = vmatprep.subr.mxu0 0.0
        %413 = vmatpush1.msra.mxu0 %v384
        %414 = vmatprep.subr.mxu0 0.0
        %415 = vmatpush1.msra.mxu0 %v385
        %416 = vmatprep.subr.mxu0 0.0
        %417 = vmatpush1.msra.mxu0 %v386
        %418 = vmatprep.subr.mxu0 0.0
        %419 = vmatpush1.msra.mxu0 %v387
        %420 = vmatprep.subr.mxu0 0.0
        %421 = vmatpush1.msra.mxu0 0.0
        %422 = vmatprep.subr.mxu0 0.0
        %423 = vmatpush1.msra.mxu0 0.0
        %424 = vmatprep.subr.mxu0 0.0
        %425 = vmatpush1.msra.mxu0 0.0
        %426 = vmatprep.subr.mxu0 0.0
        %427 = vmatpush1.msra.mxu0 0.0
        %428 = vmatprep.subr.mxu0 0.0
        %429 = vmatpush1.msra.mxu0 0.0
        %430 = vmatprep.subr.mxu0 0.0
        %431 = vmatpush1.msra.mxu0 0.0
        %432 = vmatprep.subr.mxu0 0.0
        %433 = vmatpush1.msra.mxu0 0.0
        %434 = vmatprep.subr.mxu0 0.0
        %435 = vmatpush1.msra.mxu0 0.0
        %436 = vmatprep.subr.mxu0 0.0
        %437 = vmatpush1.msra.mxu0 0.0
        %438 = vmatprep.subr.mxu0 0.0
        %439 = vmatpush1.msra.mxu0 0.0
        %440 = vmatprep.subr.mxu0 0.0
        %441 = vmatpush1.msra.mxu0 0.0
        %442 = vmatprep.subr.mxu0 0.0
        %443 = vmatpush1.msra.mxu0 0.0
        %444 = vmatprep.subr.mxu0 0.0
        %445 = vmatpush1.msra.mxu0 0.0
        %446 = vmatprep.subr.mxu0 0.0
        %447 = vmatpush1.msra.mxu0 0.0
        %448 = vmatprep.subr.mxu0 0.0
        %449 = vmatpush1.msra.mxu0 0.0
        %450 = vmatprep.subr.mxu0 0.0
        %451 = vmatpush1.msra.mxu0 0.0
        %452 = vmatprep.subr.mxu0 0.0
        %453 = vmatpush1.msra.mxu0 0.0
        %454 = vmatprep.subr.mxu0 0.0
        %455 = vmatpush1.msra.mxu0 0.0
        %456 = vmatprep.subr.mxu0 0.0
        %457 = vmatpush1.msra.mxu0 0.0
        %458 = vmatprep.subr.mxu0 0.0
        %459 = vmatpush1.msra.mxu0 0.0
        %460 = vmatprep.subr.mxu0 0.0
        %461 = vmatpush1.msra.mxu0 0.0
        %462 = vmatprep.subr.mxu0 0.0
        %463 = vmatpush1.msra.mxu0 0.0
        %464 = vmatprep.subr.mxu0 0.0
        %465 = vmatpush1.msra.mxu0 0.0
        %466 = vmatprep.subr.mxu0 0.0
        %467 = vmatpush1.msra.mxu0 0.0
        %468 = vmatprep.subr.mxu0 0.0
        %469 = vmatpush1.msra.mxu0 0.0
        %470 = vmatprep.subr.mxu0 0.0
        %471 = vmatpush1.msra.mxu0 0.0
        %472 = vmatprep.subr.mxu0 0.0
        %473 = vmatpush1.msra.mxu0 0.0
        %474 = vmatprep.subr.mxu0 0.0
        %475 = vmatpush1.msra.mxu0 0.0
        %476 = vmatprep.mubr.f32.mxu0 0.0
        %477 = vmatmul.mubr.f32.gmra.mrb[0].mxu0 %v410
        %v478 = vpop.f32.mrb[0].mxu0
        %v479 = vadd.f32 0.0, %v478
        %v480 = vpop.f32.mrb[0].mxu0
        %481 = vdwg.mxu0
        %v483 = vcombine.high %v479, %v479
        %v485 = vunpack.c.l.s4 1966171168
        %v486 = vunpack.c.0.s8 %v485
        %v487 = vlaneseq
        %v488 = vshrl.u32 %v487, 7
        %v489 = vsub.s32 %v486, %v488
        %v490 = vrot.slane %v479, %v489
        %v492 = vunpack.c.l.s4 1966171168
        %v493 = vunpack.c.0.s8 %v492
        %v494 = vlaneseq
        %v495 = vshrl.u32 %v494, 7
        %v496 = vsub.s32 %v493, %v495
        %v497 = vrot.slane %v483, %v496
        %v498 = vcombine.high %v490, %v490
        %v499 = vcombine.high %v497, %v497
        %v501 = vunpack.c.l.s4 1966171168
        %v502 = vunpack.c.0.s8 %v501
        %v503 = vlaneseq
        %v504 = vshrl.u32 %v503, 7
        %v505 = vsub.s32 %v502, %v504
        %v506 = vrot.slane %v490, %v505
        %v508 = vunpack.c.l.s4 1966171168
        %v509 = vunpack.c.0.s8 %v508
        %v510 = vlaneseq
        %v511 = vshrl.u32 %v510, 7
        %v512 = vsub.s32 %v509, %v511
        %v513 = vrot.slane %v497, %v512
        %v515 = vunpack.c.l.s4 1966171168
        %v516 = vunpack.c.0.s8 %v515
        %v517 = vlaneseq
        %v518 = vshrl.u32 %v517, 7
        %v519 = vsub.s32 %v516, %v518
        %v520 = vrot.slane %v498, %v519
        %v522 = vunpack.c.l.s4 1966171168
        %v523 = vunpack.c.0.s8 %v522
        %v524 = vlaneseq
        %v525 = vshrl.u32 %v524, 7
        %v526 = vsub.s32 %v523, %v525
        %v527 = vrot.slane %v499, %v526
        %v528 = vcombine.high %v506, %v506
        %v529 = vcombine.high %v513, %v513
        %v530 = vcombine.high %v520, %v520
        %v531 = vcombine.high %v527, %v527
        %v532 = vlaneseq
        %v533 = vshrl.u32 %v532, 7
        %v534 = vsub.s32 0, %v533
        %v535 = vrot.slane %v506, %v534
        %v536 = vlaneseq
        %v537 = vshrl.u32 %v536, 7
        %v538 = vsub.s32 0, %v537
        %v539 = vrot.slane %v520, %v538
        %v540 = vlaneseq
        %v541 = vshrl.u32 %v540, 7
        %v542 = vsub.s32 0, %v541
        %v543 = vrot.slane %v528, %v542
        %v544 = vlaneseq
        %v545 = vshrl.u32 %v544, 7
        %v546 = vsub.s32 0, %v545
        %v547 = vrot.slane %v530, %v546
        %v548 = vlaneseq
        %v549 = vshrl.u32 %v548, 7
        %v550 = vsub.s32 0, %v549
        %v551 = vrot.slane %v513, %v550
        %v552 = vlaneseq
        %v553 = vshrl.u32 %v552, 7
        %v554 = vsub.s32 0, %v553
        %v555 = vrot.slane %v527, %v554
        %v556 = vlaneseq
        %v557 = vshrl.u32 %v556, 7
        %v558 = vsub.s32 0, %v557
        %v559 = vrot.slane %v529, %v558
        %v560 = vlaneseq
        %v561 = vshrl.u32 %v560, 7
        %v562 = vsub.s32 0, %v561
        %v563 = vrot.slane %v531, %v562
        %v572 = vmul.f32 %v310, %v535
        %v573 = vmul.f32 %v311, %v539
        %v574 = vmul.f32 %v312, %v543
        %v575 = vmul.f32 %v313, %v547
        %v576 = vmul.f32 %v314, %v551
        %v577 = vmul.f32 %v315, %v555
        %v578 = vmul.f32 %v316, %v559
        %v579 = vmul.f32 %v317, %v563
        %v580 = vsel %vm318, %v572, 0.0
        %581 = vadd.xlane.f32.xlu0 %v580
        %v582 = vpop.xlane.xlu0 %581
        %v583 = vsel %vm318, %v573, 0.0
        %584 = vadd.xlane.f32.xlu0 %v583
        %v585 = vpop.xlane.xlu0 %584
        %v586 = vsel %vm318, %v574, 0.0
        %587 = vadd.xlane.f32.xlu0 %v586
        %v588 = vpop.xlane.xlu0 %587
        %v589 = vsel %vm318, %v575, 0.0
        %590 = vadd.xlane.f32.xlu0 %v589
        %v591 = vpop.xlane.xlu0 %590
        %v592 = vsel %vm318, %v576, 0.0
        %593 = vadd.xlane.f32.xlu0 %v592
        %v594 = vpop.xlane.xlu0 %593
        %v595 = vsel %vm318, %v577, 0.0
        %596 = vadd.xlane.f32.xlu0 %v595
        %v597 = vpop.xlane.xlu0 %596
        %v598 = vsel %vm318, %v578, 0.0
        %599 = vadd.xlane.f32.xlu0 %v598
        %v600 = vpop.xlane.xlu0 %599
        %v601 = vsel %vm318, %v579, 0.0
        %602 = vadd.xlane.f32.xlu0 %v601
        %v603 = vpop.xlane.xlu0 %602
        %s604 = sld [smem:[#allocation2]]
        %v605 = vstv %s604
        %v606 = vadd.f32 %v582, %v605
        %v607 = vadd.f32 %v585, %v605
        %v608 = vadd.f32 %v588, %v605
        %v609 = vadd.f32 %v591, %v605
        %v610 = vadd.f32 %v594, %v605
        %v611 = vadd.f32 %v597, %v605
        %v612 = vadd.f32 %v600, %v605
        %v613 = vadd.f32 %v603, %v605
        %v614 = vtanh.pop %v606
        %v615 = vtanh.pop %v607
        %v616 = vtanh.pop %v608
        %v617 = vtanh.pop %v609
        %v618 = vtanh.pop %v610
        %v619 = vtanh.pop %v611
        %v620 = vtanh.pop %v612
        %v621 = vtanh.pop %v613
        %v630 = vlaneseq
        %v631 = vand.u32 %v630, 127
        %v632 = vlaneseq
        %v633 = vshrl.u32 %v632, 7
        %v634 = vsub.s32 %v631, %v633
        %v635 = vrot.slane %v614, %v634
        %v636 = vlaneseq
        %v637 = vshrl.u32 %v636, 7
        %v638 = vsub.s32 %v631, %v637
        %v639 = vrot.slane %v615, %v638
        %v640 = vlaneseq
        %v641 = vshrl.u32 %v640, 7
        %v642 = vsub.s32 %v631, %v641
        %v643 = vrot.slane %v616, %v642
        %v644 = vlaneseq
        %v645 = vshrl.u32 %v644, 7
        %v646 = vsub.s32 %v631, %v645
        %v647 = vrot.slane %v617, %v646
        %v648 = vlaneseq
        %v649 = vshrl.u32 %v648, 7
        %v650 = vsub.s32 %v631, %v649
        %v651 = vrot.slane %v618, %v650
        %v652 = vlaneseq
        %v653 = vshrl.u32 %v652, 7
        %v654 = vsub.s32 %v631, %v653
        %v655 = vrot.slane %v619, %v654
        %v656 = vlaneseq
        %v657 = vshrl.u32 %v656, 7
        %v658 = vsub.s32 %v631, %v657
        %v659 = vrot.slane %v620, %v658
        %v660 = vlaneseq
        %v661 = vshrl.u32 %v660, 7
        %v662 = vsub.s32 %v631, %v661
        %v663 = vrot.slane %v621, %v662
        %v664 = vsel %vm396, %v639, %v635
        %v665 = vsel %vm398, %v643, %v664
        %v666 = vsel %vm400, %v647, %v665
        %v667 = vsel %vm402, %v651, %v666
        %v668 = vsel %vm404, %v655, %v667
        %v669 = vsel %vm406, %v659, %v668
        %v670 = vsel %vm408, %v663, %v669
        %vm672 = vcmask 64512
        %v673 = vsel %vm672, %v670, -inf
        %674 = vmax.xlane.f32.xlu0 %v673
        %v675 = vpop.xlane.xlu0 %674
        %v677 = vlaneseq
        %v678 = vshrl.u32 %v677, 7
        %v679 = vsub.s32 0, %v678
        %v680 = vrot.slane %v675, %v679
        %v681 = vlaneseq
        %v682 = vshrl.u32 %v681, 7
        %v683 = vsub.s32 1, %v682
        %v684 = vrot.slane %v675, %v683
        %v685 = vlaneseq
        %v686 = vshrl.u32 %v685, 7
        %v687 = vsub.s32 2, %v686
        %v688 = vrot.slane %v675, %v687
        %v689 = vlaneseq
        %v690 = vshrl.u32 %v689, 7
        %v691 = vsub.s32 3, %v690
        %v692 = vrot.slane %v675, %v691
        %v693 = vlaneseq
        %v694 = vshrl.u32 %v693, 7
        %v695 = vsub.s32 4, %v694
        %v696 = vrot.slane %v675, %v695
        %v697 = vlaneseq
        %v698 = vshrl.u32 %v697, 7
        %v699 = vsub.s32 5, %v698
        %v700 = vrot.slane %v675, %v699
        %v701 = vlaneseq
        %v702 = vshrl.u32 %v701, 7
        %v703 = vsub.s32 6, %v702
        %v704 = vrot.slane %v675, %v703
        %v705 = vlaneseq
        %v706 = vshrl.u32 %v705, 7
        %v707 = vsub.s32 7, %v706
        %v708 = vrot.slane %v675, %v707
        %v717 = vsub.f32 %v614, %v680
        %v718 = vsub.f32 %v615, %v684
        %v719 = vsub.f32 %v616, %v688
        %v720 = vsub.f32 %v617, %v692
        %v721 = vsub.f32 %v618, %v696
        %v722 = vsub.f32 %v619, %v700
        %v723 = vsub.f32 %v620, %v704
        %v724 = vsub.f32 %v621, %v708
        %v725 = vmul.f32 %v717, 1.442695
        %v726 = vpow.pop %v725
        %v727 = vmul.f32 %v718, 1.442695
        %v728 = vpow.pop %v727
        %v729 = vmul.f32 %v719, 1.442695
        %v730 = vpow.pop %v729
        %v731 = vmul.f32 %v720, 1.442695
        %v732 = vpow.pop %v731
        %v733 = vmul.f32 %v721, 1.442695
        %v734 = vpow.pop %v733
        %v735 = vmul.f32 %v722, 1.442695
        %v736 = vpow.pop %v735
        %v737 = vmul.f32 %v723, 1.442695
        %v738 = vpow.pop %v737
        %v739 = vmul.f32 %v724, 1.442695
        %v740 = vpow.pop %v739
        %749 = vset.pattern.permute.xlu0 0
        %750 = vperm.xlu0 %749, %v726
        %v751 = vpop.permute.xlu0 %750
        %752 = vset.pattern.permute.xlu0 0
        %753 = vperm.xlu0 %752, %v728
        %v754 = vpop.permute.xlu0 %753
        %755 = vset.pattern.permute.xlu0 0
        %756 = vperm.xlu0 %755, %v730
        %v757 = vpop.permute.xlu0 %756
        %758 = vset.pattern.permute.xlu0 0
        %759 = vperm.xlu0 %758, %v732
        %v760 = vpop.permute.xlu0 %759
        %761 = vset.pattern.permute.xlu0 0
        %762 = vperm.xlu0 %761, %v734
        %v763 = vpop.permute.xlu0 %762
        %764 = vset.pattern.permute.xlu0 0
        %765 = vperm.xlu0 %764, %v736
        %v766 = vpop.permute.xlu0 %765
        %767 = vset.pattern.permute.xlu0 0
        %768 = vperm.xlu0 %767, %v738
        %v769 = vpop.permute.xlu0 %768
        %770 = vset.pattern.permute.xlu0 0
        %771 = vperm.xlu0 %770, %v740
        %v772 = vpop.permute.xlu0 %771
        %v773 = vlaneseq
        %v774 = vshrl.u32 %v773, 7
        %v775 = vsub.s32 %v631, %v774
        %v776 = vrot.slane %v751, %v775
        %v777 = vlaneseq
        %v778 = vshrl.u32 %v777, 7
        %v779 = vsub.s32 %v631, %v778
        %v780 = vrot.slane %v754, %v779
        %v781 = vlaneseq
        %v782 = vshrl.u32 %v781, 7
        %v783 = vsub.s32 %v631, %v782
        %v784 = vrot.slane %v757, %v783
        %v785 = vlaneseq
        %v786 = vshrl.u32 %v785, 7
        %v787 = vsub.s32 %v631, %v786
        %v788 = vrot.slane %v760, %v787
        %v789 = vlaneseq
        %v790 = vshrl.u32 %v789, 7
        %v791 = vsub.s32 %v631, %v790
        %v792 = vrot.slane %v763, %v791
        %v793 = vlaneseq
        %v794 = vshrl.u32 %v793, 7
        %v795 = vsub.s32 %v631, %v794
        %v796 = vrot.slane %v766, %v795
        %v797 = vlaneseq
        %v798 = vshrl.u32 %v797, 7
        %v799 = vsub.s32 %v631, %v798
        %v800 = vrot.slane %v769, %v799
        %v801 = vlaneseq
        %v802 = vshrl.u32 %v801, 7
        %v803 = vsub.s32 %v631, %v802
        %v804 = vrot.slane %v772, %v803
        %v805 = vsel %vm396, %v780, %v776
        %v806 = vsel %vm398, %v784, %v805
        %v807 = vsel %vm400, %v788, %v806
        %v808 = vsel %vm402, %v792, %v807
        %v809 = vsel %vm404, %v796, %v808
        %v810 = vsel %vm406, %v800, %v809
        %v811 = vsel %vm408, %v804, %v810
        %v813 = vsel %vm672, %v811, 0.0
        %814 = vadd.xlane.f32.xlu0 %v813
        %v815 = vpop.xlane.xlu0 %814
        %v816 = vrcp.pop %v815
        %v818 = vlaneseq
        %v819 = vshrl.u32 %v818, 7
        %v820 = vsub.s32 0, %v819
        %v821 = vrot.slane %v816, %v820
        %v822 = vlaneseq
        %v823 = vshrl.u32 %v822, 7
        %v824 = vsub.s32 1, %v823
        %v825 = vrot.slane %v816, %v824
        %v826 = vlaneseq
        %v827 = vshrl.u32 %v826, 7
        %v828 = vsub.s32 2, %v827
        %v829 = vrot.slane %v816, %v828
        %v830 = vlaneseq
        %v831 = vshrl.u32 %v830, 7
        %v832 = vsub.s32 3, %v831
        %v833 = vrot.slane %v816, %v832
        %v834 = vlaneseq
        %v835 = vshrl.u32 %v834, 7
        %v836 = vsub.s32 4, %v835
        %v837 = vrot.slane %v816, %v836
        %v838 = vlaneseq
        %v839 = vshrl.u32 %v838, 7
        %v840 = vsub.s32 5, %v839
        %v841 = vrot.slane %v816, %v840
        %v842 = vlaneseq
        %v843 = vshrl.u32 %v842, 7
        %v844 = vsub.s32 6, %v843
        %v845 = vrot.slane %v816, %v844
        %v846 = vlaneseq
        %v847 = vshrl.u32 %v846, 7
        %v848 = vsub.s32 7, %v847
        %v849 = vrot.slane %v816, %v848
        %v858 = vmul.f32 %v726, %v821
        %v859 = vmul.f32 %v728, %v825
        %v860 = vmul.f32 %v730, %v829
        %v861 = vmul.f32 %v732, %v833
        %v862 = vmul.f32 %v734, %v837
        %v863 = vmul.f32 %v736, %v841
        %v864 = vmul.f32 %v738, %v845
        %v865 = vmul.f32 %v740, %v849
        %867 = vset.pattern.permute.xlu0 0
        %868 = vperm.xlu0 %867, %v858
        %v869 = vpop.permute.xlu0 %868
        %872 = vset.pattern.permute.xlu0 0
        %873 = vperm.xlu0 %872, %v859
        %v874 = vpop.permute.xlu0 %873
        %877 = vset.pattern.permute.xlu0 0
        %878 = vperm.xlu0 %877, %v860
        %v879 = vpop.permute.xlu0 %878
        %882 = vset.pattern.permute.xlu0 0
        %883 = vperm.xlu0 %882, %v861
        %v884 = vpop.permute.xlu0 %883
        %887 = vset.pattern.permute.xlu0 0
        %888 = vperm.xlu0 %887, %v862
        %v889 = vpop.permute.xlu0 %888
        %892 = vset.pattern.permute.xlu0 0
        %893 = vperm.xlu0 %892, %v863
        %v894 = vpop.permute.xlu0 %893
        %897 = vset.pattern.permute.xlu0 0
        %898 = vperm.xlu0 %897, %v864
        %v899 = vpop.permute.xlu0 %898
        %902 = vset.pattern.permute.xlu0 0
        %903 = vperm.xlu0 %902, %v865
        %v904 = vpop.permute.xlu0 %903
        %v906 = vmul.f32 %v869, %v310
        %v907 = vmul.f32 %v874, %v311
        %v908 = vmul.f32 %v879, %v312
        %v909 = vmul.f32 %v884, %v313
        %v910 = vmul.f32 %v889, %v314
        %v911 = vmul.f32 %v894, %v315
        %v912 = vmul.f32 %v899, %v316
        %v913 = vmul.f32 %v904, %v317
        %v914 = vsel %vm318, %v906, 0.0
        %v915 = vrot.slane %v914, 4
        %v916 = vadd.f32 %v914, %v915
        %v917 = vrot.slane %v916, 2
        %v918 = vadd.f32 %v916, %v917
        %v919 = vrot.slane %v918, 1
        %v920 = vadd.f32 %v918, %v919
        %v921 = vsel %vm318, %v907, 0.0
        %v922 = vrot.slane %v921, 4
        %v923 = vadd.f32 %v921, %v922
        %v924 = vrot.slane %v923, 2
        %v925 = vadd.f32 %v923, %v924
        %v926 = vrot.slane %v925, 1
        %v927 = vadd.f32 %v925, %v926
        %v928 = vsel %vm318, %v908, 0.0
        %v929 = vrot.slane %v928, 4
        %v930 = vadd.f32 %v928, %v929
        %v931 = vrot.slane %v930, 2
        %v932 = vadd.f32 %v930, %v931
        %v933 = vrot.slane %v932, 1
        %v934 = vadd.f32 %v932, %v933
        %v935 = vsel %vm318, %v909, 0.0
        %v936 = vrot.slane %v935, 4
        %v937 = vadd.f32 %v935, %v936
        %v938 = vrot.slane %v937, 2
        %v939 = vadd.f32 %v937, %v938
        %v940 = vrot.slane %v939, 1
        %v941 = vadd.f32 %v939, %v940
        %v942 = vsel %vm318, %v910, 0.0
        %v943 = vrot.slane %v942, 4
        %v944 = vadd.f32 %v942, %v943
        %v945 = vrot.slane %v944, 2
        %v946 = vadd.f32 %v944, %v945
        %v947 = vrot.slane %v946, 1
        %v948 = vadd.f32 %v946, %v947
        %v949 = vsel %vm318, %v911, 0.0
        %v950 = vrot.slane %v949, 4
        %v951 = vadd.f32 %v949, %v950
        %v952 = vrot.slane %v951, 2
        %v953 = vadd.f32 %v951, %v952
        %v954 = vrot.slane %v953, 1
        %v955 = vadd.f32 %v953, %v954
        %v956 = vsel %vm318, %v912, 0.0
        %v957 = vrot.slane %v956, 4
        %v958 = vadd.f32 %v956, %v957
        %v959 = vrot.slane %v958, 2
        %v960 = vadd.f32 %v958, %v959
        %v961 = vrot.slane %v960, 1
        %v962 = vadd.f32 %v960, %v961
        %v963 = vsel %vm318, %v913, 0.0
        %v964 = vrot.slane %v963, 4
        %v965 = vadd.f32 %v963, %v964
        %v966 = vrot.slane %v965, 2
        %v967 = vadd.f32 %v965, %v966
        %v968 = vrot.slane %v967, 1
        %v969 = vadd.f32 %v967, %v968
        %v970 = vld [vmem:[%s3] sm:$0xff]
        %v971 = vld [vmem:[%s3 + $0x8] sm:$0xff]
        %v972 = vld [vmem:[%s3 + $0x10] sm:$0xff]
        %v973 = vld [vmem:[%s3 + $0x18] sm:$0xff]
        %v974 = vld [vmem:[%s4] sm:$0x1]
        %v976 = vlaneseq
        %v977 = vshrl.u32 %v976, 7
        %v978 = vsub.s32 0, %v977
        %v979 = vrot.slane %v974, %v978
        %v989 = vsel %vm396, %v927, %v920
        %v990 = vsel %vm398, %v934, %v989
        %v991 = vsel %vm400, %v941, %v990
        %v992 = vsel %vm402, %v948, %v991
        %v993 = vsel %vm404, %v955, %v992
        %v994 = vsel %vm406, %v962, %v993
        %v995 = vsel %vm408, %v969, %v994
        %v996 = vsel %vm318, %v995, 0
        %998 = vmatprep.subr.mxu0 0.0
        %999 = vmatpush1.msra.mxu0 %v970
        %1000 = vmatprep.subr.mxu0 0.0
        %1001 = vmatpush1.msra.mxu0 %v971
        %1002 = vmatprep.subr.mxu0 0.0
        %1003 = vmatpush1.msra.mxu0 %v972
        %1004 = vmatprep.subr.mxu0 0.0
        %1005 = vmatpush1.msra.mxu0 %v973
        %1006 = vmatprep.subr.mxu0 0.0
        %1007 = vmatpush1.msra.mxu0 0.0
        %1008 = vmatprep.subr.mxu0 0.0
        %1009 = vmatpush1.msra.mxu0 0.0
        %1010 = vmatprep.subr.mxu0 0.0
        %1011 = vmatpush1.msra.mxu0 0.0
        %1012 = vmatprep.subr.mxu0 0.0
        %1013 = vmatpush1.msra.mxu0 0.0
        %1014 = vmatprep.subr.mxu0 0.0
        %1015 = vmatpush1.msra.mxu0 0.0
        %1016 = vmatprep.subr.mxu0 0.0
        %1017 = vmatpush1.msra.mxu0 0.0
        %1018 = vmatprep.subr.mxu0 0.0
        %1019 = vmatpush1.msra.mxu0 0.0
        %1020 = vmatprep.subr.mxu0 0.0
        %1021 = vmatpush1.msra.mxu0 0.0
        %1022 = vmatprep.subr.mxu0 0.0
        %1023 = vmatpush1.msra.mxu0 0.0
        %1024 = vmatprep.subr.mxu0 0.0
        %1025 = vmatpush1.msra.mxu0 0.0
        %1026 = vmatprep.subr.mxu0 0.0
        %1027 = vmatpush1.msra.mxu0 0.0
        %1028 = vmatprep.subr.mxu0 0.0
        %1029 = vmatpush1.msra.mxu0 0.0
        %1030 = vmatprep.subr.mxu0 0.0
        %1031 = vmatpush1.msra.mxu0 0.0
        %1032 = vmatprep.subr.mxu0 0.0
        %1033 = vmatpush1.msra.mxu0 0.0
        %1034 = vmatprep.subr.mxu0 0.0
        %1035 = vmatpush1.msra.mxu0 0.0
        %1036 = vmatprep.subr.mxu0 0.0
        %1037 = vmatpush1.msra.mxu0 0.0
        %1038 = vmatprep.subr.mxu0 0.0
        %1039 = vmatpush1.msra.mxu0 0.0
        %1040 = vmatprep.subr.mxu0 0.0
        %1041 = vmatpush1.msra.mxu0 0.0
        %1042 = vmatprep.subr.mxu0 0.0
        %1043 = vmatpush1.msra.mxu0 0.0
        %1044 = vmatprep.subr.mxu0 0.0
        %1045 = vmatpush1.msra.mxu0 0.0
        %1046 = vmatprep.subr.mxu0 0.0
        %1047 = vmatpush1.msra.mxu0 0.0
        %1048 = vmatprep.subr.mxu0 0.0
        %1049 = vmatpush1.msra.mxu0 0.0
        %1050 = vmatprep.subr.mxu0 0.0
        %1051 = vmatpush1.msra.mxu0 0.0
        %1052 = vmatprep.subr.mxu0 0.0
        %1053 = vmatpush1.msra.mxu0 0.0
        %1054 = vmatprep.subr.mxu0 0.0
        %1055 = vmatpush1.msra.mxu0 0.0
        %1056 = vmatprep.subr.mxu0 0.0
        %1057 = vmatpush1.msra.mxu0 0.0
        %1058 = vmatprep.subr.mxu0 0.0
        %1059 = vmatpush1.msra.mxu0 0.0
        %1060 = vmatprep.subr.mxu0 0.0
        %1061 = vmatpush1.msra.mxu0 0.0
        %1062 = vmatprep.mubr.f32.mxu0 0.0
        %1063 = vmatmul.mubr.f32.gmra.mrb[0].mxu0 %v996
        %v1064 = vpop.f32.mrb[0].mxu0
        %v1065 = vadd.f32 %v979, %v1064
        %v1066 = vpop.f32.mrb[0].mxu0
        %1067 = vdwg.mxu0
        %vm1068 = vcmask 80896
        %v1069 = vsel %vm1068, %v1065, -inf
        %1070 = vmax.xlane.f32.xlu0 %v1069
        %v1071 = vpop.xlane.xlu0 %1070
        %v1072 = vsub.f32 %v1065, %v1071
        %v1073 = vmul.f32 %v1072, 1.442695
        %v1074 = vpow.pop %v1073
        %v1075 = vsel %vm1068, %v1074, 0.0
        %1076 = vadd.xlane.f32.xlu0 %v1075
        %v1077 = vpop.xlane.xlu0 %1076
        %v1078 = vrcp.pop %v1077
        %v1079 = vmul.f32 %v1074, %v1078
        %v1080 = vld [vmem:[%s5] sm:$0xff]
        %v1081 = vld [vmem:[%s5 + $0x8] sm:$0x3]
        %v1083 = vsel %vm1068, %v1079, 0
        %vm1085 = vcmask 1041408
        %v1087 = vsel %vm1085, %v1081, 0
        %1089 = vmatprep.subr.mxu0 0.0
        %1090 = vmatpush1.msra.mxu0 %v1080
        %1091 = vmatprep.subr.mxu0 0.0
        %1092 = vmatpush1.msra.mxu0 %v1087
        %1093 = vmatprep.subr.mxu0 0.0
        %1094 = vmatpush1.msra.mxu0 0.0
        %1095 = vmatprep.subr.mxu0 0.0
        %1096 = vmatpush1.msra.mxu0 0.0
        %1097 = vmatprep.subr.mxu0 0.0
        %1098 = vmatpush1.msra.mxu0 0.0
        %1099 = vmatprep.subr.mxu0 0.0
        %1100 = vmatpush1.msra.mxu0 0.0
        %1101 = vmatprep.subr.mxu0 0.0
        %1102 = vmatpush1.msra.mxu0 0.0
        %1103 = vmatprep.subr.mxu0 0.0
        %1104 = vmatpush1.msra.mxu0 0.0
        %1105 = vmatprep.subr.mxu0 0.0
        %1106 = vmatpush1.msra.mxu0 0.0
        %1107 = vmatprep.subr.mxu0 0.0
        %1108 = vmatpush1.msra.mxu0 0.0
        %1109 = vmatprep.subr.mxu0 0.0
        %1110 = vmatpush1.msra.mxu0 0.0
        %1111 = vmatprep.subr.mxu0 0.0
        %1112 = vmatpush1.msra.mxu0 0.0
        %1113 = vmatprep.subr.mxu0 0.0
        %1114 = vmatpush1.msra.mxu0 0.0
        %1115 = vmatprep.subr.mxu0 0.0
        %1116 = vmatpush1.msra.mxu0 0.0
        %1117 = vmatprep.subr.mxu0 0.0
        %1118 = vmatpush1.msra.mxu0 0.0
        %1119 = vmatprep.subr.mxu0 0.0
        %1120 = vmatpush1.msra.mxu0 0.0
        %1121 = vmatprep.subr.mxu0 0.0
        %1122 = vmatpush1.msra.mxu0 0.0
        %1123 = vmatprep.subr.mxu0 0.0
        %1124 = vmatpush1.msra.mxu0 0.0
        %1125 = vmatprep.subr.mxu0 0.0
        %1126 = vmatpush1.msra.mxu0 0.0
        %1127 = vmatprep.subr.mxu0 0.0
        %1128 = vmatpush1.msra.mxu0 0.0
        %1129 = vmatprep.subr.mxu0 0.0
        %1130 = vmatpush1.msra.mxu0 0.0
        %1131 = vmatprep.subr.mxu0 0.0
        %1132 = vmatpush1.msra.mxu0 0.0
        %1133 = vmatprep.subr.mxu0 0.0
        %1134 = vmatpush1.msra.mxu0 0.0
        %1135 = vmatprep.subr.mxu0 0.0
        %1136 = vmatpush1.msra.mxu0 0.0
        %1137 = vmatprep.subr.mxu0 0.0
        %1138 = vmatpush1.msra.mxu0 0.0
        %1139 = vmatprep.subr.mxu0 0.0
        %1140 = vmatpush1.msra.mxu0 0.0
        %1141 = vmatprep.subr.mxu0 0.0
        %1142 = vmatpush1.msra.mxu0 0.0
        %1143 = vmatprep.subr.mxu0 0.0
        %1144 = vmatpush1.msra.mxu0 0.0
        %1145 = vmatprep.subr.mxu0 0.0
        %1146 = vmatpush1.msra.mxu0 0.0
        %1147 = vmatprep.subr.mxu0 0.0
        %1148 = vmatpush1.msra.mxu0 0.0
        %1149 = vmatprep.subr.mxu0 0.0
        %1150 = vmatpush1.msra.mxu0 0.0
        %1151 = vmatprep.subr.mxu0 0.0
        %1152 = vmatpush1.msra.mxu0 0.0
        %1153 = vmatprep.mubr.f32.mxu0 0.0
        %1154 = vmatmul.mubr.f32.gmra.mrb[0].mxu0 %v1083
        %v1155 = vpop.f32.mrb[0].mxu0
        %v1156 = vadd.f32 0.0, %v1155
        %v1157 = vpop.f32.mrb[0].mxu0
        %1158 = vdwg.mxu0
        %1159 = vst.msk [vmem:[%s301] sm:$0xff] %vm318, %v1156
        %1160 = vst.msk [vmem:[%s308] sm:$0xff] %vm1068, %v1079
        %s1161 = sand.u32 %s168, 1
        %s1162 = scalar_lea.sflag [#allocation5], %s1161
        %s1163 = sand.u32 %s168, 1
        %s1164 = smul.addr %s1163, 8
        %s1165 = scalar_lea.vmem [#allocation6], %s1164
        %s1166 = sand.u32 %s194, 1
        %s1167 = scalar_lea.sflag [#allocation8], %s1166
        %s1168 = sand.u32 %s194, 1
        %s1169 = smul.addr %s1168, 8
        %s1170 = scalar_lea.vmem [#allocation7], %s1169
        // Predicated region
        $region49: #{tpu_custom_call.1} parent=43 // pred_check
          %p1171 = pneg %p178
        $region50: #{tpu_custom_call.1} parent=43 // pred_check_branch
          %1173 = sbr.rel (%p1171) target = $region52
        $region51: #{tpu_custom_call.1} parent=43 // pred_region
          %s1175 = ssub.s32 128, 128
          %1176 = vsyncadd %s1162, %s1175
          %s1177 = smul.addr %s29, 128
          %s1178 = scalar_lea.hbm %s6, %s1177
          %s1180 = sshll.u32 %s1165, 4
          %s1181 = int_to_ptr.vmem [resolvable:$true] %s1180
          %1183 = dma.vmem_to_hbm [thread:$0]  %s1181, 128, %s1178, %s1162
        $region52: #{tpu_custom_call.1} parent=43 // pred_fallthru
          _
        // Predicated region
        $region53: #{tpu_custom_call.1} parent=43 // pred_check
          %p1184 = pneg %p204
        $region54: #{tpu_custom_call.1} parent=43 // pred_check_branch
          %1186 = sbr.rel (%p1184) target = $region56
        $region55: #{tpu_custom_call.1} parent=43 // pred_region
          %s1188 = ssub.s32 128, 128
          %1189 = vsyncadd %s1167, %s1188
          %s1190 = smul.addr %s29, 128
          %s1191 = scalar_lea.hbm %s7, %s1190
          %s1193 = sshll.u32 %s1170, 4
          %s1194 = int_to_ptr.vmem [resolvable:$true] %s1193
          %1196 = dma.vmem_to_hbm [thread:$0]  %s1194, 128, %s1191, %s1167
        $region56: #{tpu_custom_call.1} parent=43 // pred_fallthru
          _
      $region44: #{tpu_custom_call.1} parent=5 // pred_fallthru
        _
      %p1197 = scmp.le.s32.totalorder 2, %s24
      // Predicated region
      $region57: #{tpu_custom_call.1} parent=5 // pred_check
        %p1198 = pneg %p1197
      $region58: #{tpu_custom_call.1} parent=5 // pred_check_branch
        %1200 = sbr.rel (%p1198) target = $region60
      $region59: #{tpu_custom_call.1} parent=5 // pred_region
        %s1201 = ssub.s32 %s24, 2
        // Predicated region
        $region61: #{tpu_custom_call.1} parent=59 // pred_check
          %p1202 = pneg %p184
        $region62: #{tpu_custom_call.1} parent=59 // pred_check_branch
          %1204 = sbr.rel (%p1202) target = $region64
        $region63: #{tpu_custom_call.1} parent=59 // pred_region
          %s1205 = sand.u32 %s169, 1
          %s1206 = scalar_lea.sflag [#allocation5], %s1205
          %s1207 = sand.u32 %s169, 1
          %s1208 = smul.addr %s1207, 8
          %s1209 = scalar_lea.vmem [#allocation6], %s1208
          %1210 = dma.done %s1206, 128
        $region64: #{tpu_custom_call.1} parent=59 // pred_fallthru
          _
        // Predicated region
        $region65: #{tpu_custom_call.1} parent=59 // pred_check
          %p1211 = pneg %p210
        $region66: #{tpu_custom_call.1} parent=59 // pred_check_branch
          %1213 = sbr.rel (%p1211) target = $region68
        $region67: #{tpu_custom_call.1} parent=59 // pred_region
          %s1214 = sand.u32 %s195, 1
          %s1215 = scalar_lea.sflag [#allocation8], %s1214
          %s1216 = sand.u32 %s195, 1
          %s1217 = smul.addr %s1216, 8
          %s1218 = scalar_lea.vmem [#allocation7], %s1217
          %1219 = dma.done %s1215, 128
        $region68: #{tpu_custom_call.1} parent=59 // pred_fallthru
          _
      $region60: #{tpu_custom_call.1} parent=5 // pred_fallthru
        _
    $region6: #{tpu_custom_call.1} parent=1 // loop_footer
      %s28 = sadd.s32 1, %s24
    $region7: #{tpu_custom_call.1} parent=1 // loop_footer_branch
      %23 = sbr.rel target = $region3
    $region8: #{tpu_custom_call.1} parent=1 // loop_exit
      _
    %1220 = vsyncpa [#allocation4], 1
    %s1221 = scalar_lea.sflag [#allocation4], 1
    %1222 = vsyncpa %s1221, 1
    %1223 = vsyncpa [#allocation5], 1
    %s1224 = scalar_lea.sflag [#allocation5], 1
    %1225 = vsyncpa %s1224, 1
    %1226 = vsyncpa [#allocation8], 1
    %s1227 = scalar_lea.sflag [#allocation8], 1
    %1228 = vsyncpa %s1227, 1

</llo_original>
